<compile_context>
chip_gen: v7x
topology: tpu7x:2x2x1
jax: 0.10.0
libtpu: 0.0.40
codegen_flags: <defaults>
</compile_context>

<pallas_src>
import functools

import jax
import jax.numpy as jnp
from jax.experimental import pallas as pl
from jax.experimental.pallas import tpu as pltpu

LANES = 128
SUBLANES = 8
VREG = SUBLANES * LANES          # 1024 elements
MAX_TILE_ROWS = 8192             # 8192*128*4B = 4 MiB per f32 input block


def _rmse_sumsq_kernel(yhat_ref, y_ref, o_ref, *, tile_rows, rows, steps, need_mask):
    c = pl.program_id(0)
    s = pl.program_id(1)

    @pl.when(s == 0)
    def _():
        o_ref[...] = jnp.zeros_like(o_ref)

    d = yhat_ref[...].astype(jnp.float32) - y_ref[...].astype(jnp.float32)
    d2 = d * d

    groups = tile_rows // SUBLANES

    def fold(vals):
        # Fold (tile_rows, 128) -> (8, 128) with VPU adds only.  Use 4
        # independent partial accumulators (separate output vregs => separate
        # add chains) so the reduction is throughput-, not latency-bound.
        if groups % 4 == 0 and groups >= 8:
            p4 = jnp.sum(vals.reshape(groups // 4, 4, SUBLANES, LANES), axis=0)
            partial = jnp.sum(p4, axis=0)
        else:
            partial = jnp.sum(vals.reshape(groups, SUBLANES, LANES), axis=0)
        o_ref[...] += partial[None, :, :]

    if need_mask:
        blk = c * steps + s
        # Scalar-unit limit; <= 0 for duplicate (over-covered) blocks, in
        # (0, tile_rows) for the ragged last block, >= tile_rows otherwise.
        limit = rows - blk * tile_rows

        @pl.when(limit >= tile_rows)        # full block: no vector mask at all
        def _():
            fold(d2)

        @pl.when(limit < tile_rows)         # ragged or duplicate block
        def _():
            row_ids = jax.lax.broadcasted_iota(jnp.int32, (tile_rows, LANES), 0)
            fold(jnp.where(row_ids < limit, d2, jnp.float32(0.0)))
    else:
        fold(d2)


def _make_input_spec(tile_rows, index_map, steps):
    # Deeper buffering helps v7x (short per-step DMA vs fixed overhead); only
    # worth it with >= 3 steps.  Guarded so older jax without pipeline_mode /
    # Buffered still works with the default double buffer.
    if steps >= 3:
        try:
            return pl.BlockSpec((tile_rows, LANES), index_map,
                                pipeline_mode=pl.Buffered(3))
        except (TypeError, AttributeError):
            pass
    return pl.BlockSpec((tile_rows, LANES), index_map)


def rmse_loss(yhat, y, eps=0.001):
    """sqrt(mean((yhat - y)^2) + eps), matching torch RMSELoss.forward."""
    assert yhat.shape == y.shape, "MSELoss requires matching shapes"
    count = int(yhat.size)
    assert count > 0

    # Native dtype (cast to f32 inside the kernel) -> bf16 inputs halve HBM.
    yf = jnp.ravel(yhat)
    xf = jnp.ravel(y)

    bulk = (count // VREG) * VREG       # 1024-aligned prefix handled by kernel
    tail = count - bulk                 # < 1024 leftover handled by tiny jnp op

    total = jnp.float32(0.0)

    if bulk:
        rows = bulk // LANES            # always a multiple of 8
        # TODO(synk): for huge non-1024-aligned inputs the prefix slice below
        # may still copy; a fully copy-free path needs pl.ANY + manual DMA.
        yb = (yf if tail == 0 else yf[:bulk]).reshape(rows, LANES)
        xb = (xf if tail == 0 else xf[:bulk]).reshape(rows, LANES)

        tile_rows = min(MAX_TILE_ROWS, rows)          # multiple of 8
        nblocks = -(-rows // tile_rows)
        # Always use both TensorCores on v7x when there is >1 block; extra /
        # ragged blocks are masked out in-kernel, so odd counts are fine.
        num_shards = 2 if nblocks >= 2 else 1
        steps = -(-nblocks // num_shards)
        covered = num_shards * steps
        need_mask = (covered * tile_rows) != rows

        kernel = functools.partial(
            _rmse_sumsq_kernel,
            tile_rows=tile_rows, rows=rows, steps=steps, need_mask=need_mask)

        last_blk = nblocks - 1
        in_map = lambda c, s: (jnp.minimum(c * steps + s, last_blk), 0)
        in_spec = _make_input_spec(tile_rows, in_map, steps)

        itemsize = int(jnp.dtype(yb.dtype).itemsize)
        nbuf = 3 if steps >= 3 else 2
        block_bytes = tile_rows * LANES * itemsize
        # 2 inputs x nbuf buffers x block + headroom; explicit so v5e's 16 MiB
        # scoped default does not OOM, capped at 48 MiB for v7x's 64 MiB VMEM.
        vmem_limit = int(min(48 * 1024 * 1024,
                             max(16 * 1024 * 1024,
                                 2 * nbuf * block_bytes + 8 * 1024 * 1024)))

        cost = pl.CostEstimate(
            flops=3 * bulk,
            transcendentals=0,
            bytes_accessed=2 * bulk * itemsize + num_shards * VREG * 4)

        partials = pl.pallas_call(
            kernel,
            out_shape=jax.ShapeDtypeStruct((num_shards, SUBLANES, LANES),
                                           jnp.float32),
            grid_spec=pltpu.PrefetchScalarGridSpec(
                num_scalar_prefetch=0,
                grid=(num_shards, steps),
                in_specs=[in_spec, in_spec],
                out_specs=pl.BlockSpec((1, SUBLANES, LANES),
                                       lambda c, s: (c, 0, 0)),
            ),
            compiler_params=pltpu.CompilerParams(
                dimension_semantics=("parallel", "arbitrary"),
                vmem_limit_bytes=vmem_limit,
            ),
            cost_estimate=cost,
        )(yb, xb)

        total = total + jnp.sum(partials, dtype=jnp.float32)

    if tail:
        dt = yf[bulk:].astype(jnp.float32) - xf[bulk:].astype(jnp.float32)
        total = total + jnp.sum(dt * dt, dtype=jnp.float32)

    return jnp.sqrt(total / jnp.float32(count) + jnp.float32(eps))


if __name__ == "__main__":
    key = jax.random.PRNGKey(0)
    k1, k2, k3, k4, k5, k6, k7, k8 = jax.random.split(key, 8)

    def ref_loss(a, b, eps=0.001):
        af = a.astype(jnp.float32)
        bf = b.astype(jnp.float32)
        return jnp.sqrt(jnp.mean((af - bf) ** 2) + eps)

    # 1) NCHW-style input, 1024-aligned size (zero-copy, single block/shard).
    shape = (2, 4, 16, 16)
    yhat = jax.random.normal(k1, shape, dtype=jnp.float32)
    y = jax.random.normal(k2, shape, dtype=jnp.float32)
    loss = rmse_loss(yhat, y, eps=0.001)
    jax.block_until_ready(loss)
    assert jnp.allclose(loss, ref_loss(yhat, y), rtol=1e-5, atol=1e-6), \
        (loss, ref_loss(yhat, y))

    # 2) Tiny ragged element count (pure tail path, kernel not needed).
    shape2 = (3, 5, 7)
    yhat2 = jax.random.normal(k3, shape2, dtype=jnp.float32)
    y2 = jax.random.normal(k4, shape2, dtype=jnp.float32)
    loss2 = rmse_loss(yhat2, y2, eps=0.001)
    jax.block_until_ready(loss2)
    assert jnp.allclose(loss2, ref_loss(yhat2, y2), rtol=1e-5, atol=1e-6), \
        (loss2, ref_loss(yhat2, y2))

    # 3) Mixed: kernel bulk (2048 elems) + jnp tail (617 elems).
    shape3 = (5, 41, 13)
    yhat3 = jax.random.normal(k5, shape3, dtype=jnp.float32)
    y3 = jax.random.normal(k6, shape3, dtype=jnp.float32)
    loss3 = rmse_loss(yhat3, y3, eps=0.001)
    jax.block_until_ready(loss3)
    assert jnp.allclose(loss3, ref_loss(yhat3, y3), rtol=1e-5, atol=1e-6), \
        (loss3, ref_loss(yhat3, y3))

    # 4) Multi-block: 20480 rows -> 3 blocks, 2 shards x 2 steps; exercises the
    #    ragged-block mask and the clamped/duplicate-block mask.
    shape4 = (5, 512, 1024)
    yhat4 = jax.random.normal(k7, shape4, dtype=jnp.float32)
    y4 = jax.random.normal(k8, shape4, dtype=jnp.float32)
    loss4 = rmse_loss(yhat4, y4, eps=0.001)
    jax.block_until_ready(loss4)
    assert jnp.allclose(loss4, ref_loss(yhat4, y4), rtol=1e-4, atol=1e-6), \
        (loss4, ref_loss(yhat4, y4))

    print("KERNEL_OK")
</pallas_src>

<mosaic_0001>
module attributes {stable_mosaic.version = 11 : i64} {
  func.func @_rmse_sumsq_kernel(%arg0: i32, %arg1: i32, %arg2: memref<16x128xf32, #tpu.memory_space<vmem>>, %arg3: memref<16x128xf32, #tpu.memory_space<vmem>>, %arg4: memref<1x8x128xf32, #tpu.memory_space<vmem>>) attributes {dimension_semantics = [#tpu.dimension_semantics<parallel>, #tpu.dimension_semantics<arbitrary>], iteration_bounds = array<i64: 1, 1>, scalar_prefetch = 0 : i64, scratch_operands = 0 : i64, tpu.core_type = #tpu.core_type<tc>, window_params = [{transform_indices = @transform_0, window_bounds = array<i64: 16, 128>}, {transform_indices = @transform_1, window_bounds = array<i64: 16, 128>}, {transform_indices = @transform_2, window_bounds = array<i64: 1, 8, 128>}]} {
    %c0_i32 = arith.constant 0 : i32
    %0 = arith.cmpi eq, %arg1, %c0_i32 : i32
    %1 = arith.extui %0 : i1 to i32
    %c0_i32_0 = arith.constant 0 : i32
    %2 = arith.cmpi ne, %1, %c0_i32_0 : i32
    scf.if %2 {
      %cst_10 = arith.constant 0.000000e+00 : f32
      %13 = vector.broadcast %cst_10 : f32 to vector<1x8x128xf32>
      %c0_11 = arith.constant 0 : index
      %c0_12 = arith.constant 0 : index
      %c0_13 = arith.constant 0 : index
      %14 = vector.load %arg4[%c0_11, %c0_12, %c0_13] : memref<1x8x128xf32, #tpu.memory_space<vmem>>, vector<1x8x128xf32>
      tpu.vector_store %arg4[%c0_11, %c0_12, %c0_13], %13 {strides = array<i32>} : memref<1x8x128xf32, #tpu.memory_space<vmem>>, vector<1x8x128xf32>,
    } else {
    }
    %c0 = arith.constant 0 : index
    %c0_1 = arith.constant 0 : index
    %3 = vector.load %arg2[%c0, %c0_1] : memref<16x128xf32, #tpu.memory_space<vmem>>, vector<16x128xf32>
    %c0_2 = arith.constant 0 : index
    %c0_3 = arith.constant 0 : index
    %4 = vector.load %arg3[%c0_2, %c0_3] : memref<16x128xf32, #tpu.memory_space<vmem>>, vector<16x128xf32>
    %5 = arith.subf %3, %4 : vector<16x128xf32>
    %6 = arith.mulf %5, %5 : vector<16x128xf32>
    %7 = vector.shape_cast %6 : vector<16x128xf32> to vector<2x8x128xf32>
    %cst = arith.constant dense<0.000000e+00> : vector<8x128xf32>
    %8 = vector.multi_reduction <add>, %7, %cst [0] : vector<2x8x128xf32> to vector<8x128xf32>
    %c0_4 = arith.constant 0 : index
    %c0_5 = arith.constant 0 : index
    %c0_6 = arith.constant 0 : index
    %9 = vector.load %arg4[%c0_4, %c0_5, %c0_6] : memref<1x8x128xf32, #tpu.memory_space<vmem>>, vector<1x8x128xf32>
    %10 = vector.shape_cast %8 : vector<8x128xf32> to vector<1x8x128xf32>
    %11 = arith.addf %9, %10 : vector<1x8x128xf32>
    %c0_7 = arith.constant 0 : index
    %c0_8 = arith.constant 0 : index
    %c0_9 = arith.constant 0 : index
    %12 = vector.load %arg4[%c0_7, %c0_8, %c0_9] : memref<1x8x128xf32, #tpu.memory_space<vmem>>, vector<1x8x128xf32>
    tpu.vector_store %arg4[%c0_7, %c0_8, %c0_9], %11 {strides = array<i32>} : memref<1x8x128xf32, #tpu.memory_space<vmem>>, vector<1x8x128xf32>,
    return
  }
  func.func @transform_0(%arg0: i32, %arg1: i32) -> (i32, i32) {
    %c1_i32 = arith.constant 1 : i32
    %0 = arith.muli %arg0, %c1_i32 : i32
    %1 = arith.addi %0, %arg1 : i32
    %c0_i32 = arith.constant 0 : i32
    %2 = arith.minsi %1, %c0_i32 : i32
    %c0_i32_0 = arith.constant 0 : i32
    %c0_i32_1 = arith.constant 0 : i32
    return %2, %c0_i32_0 : i32, i32
  }
  func.func @transform_1(%arg0: i32, %arg1: i32) -> (i32, i32) {
    %c1_i32 = arith.constant 1 : i32
    %0 = arith.muli %arg0, %c1_i32 : i32
    %1 = arith.addi %0, %arg1 : i32
    %c0_i32 = arith.constant 0 : i32
    %2 = arith.minsi %1, %c0_i32 : i32
    %c0_i32_0 = arith.constant 0 : i32
    %c0_i32_1 = arith.constant 0 : i32
    return %2, %c0_i32_0 : i32, i32
  }
  func.func @transform_2(%arg0: i32, %arg1: i32) -> (i32, i32, i32) {
    %c0_i32 = arith.constant 0 : i32
    %c0_i32_0 = arith.constant 0 : i32
    %c0_i32_1 = arith.constant 0 : i32
    return %arg0, %c0_i32, %c0_i32_0 : i32, i32, i32
  }
}

</mosaic_0001>

<llo_original>
// kernel: tpu_custom_call.1
$region0: #{tpu_custom_call.1}
  #allocation0 [shape = 'u32[]', space=smem, size = 0x4, offset = 0x4, fixed_abs, tag = 'smem constant byte address 0x4 - core index']
  #allocation1 [shape = 'u32[144,128]{1,0:T(1,128)}', space=vmem, size = 0x12000, scoped, tag = 'internal scratch']
  %s0 = inlined_call_operand.hbm [shape: f32[16,128], index: 0, kind: input, shape index: {}]
  %s1 = inlined_call_operand.hbm [shape: f32[16,128], index: 1, kind: input, shape index: {}]
  %s2 = inlined_call_operand.hbm [shape: f32[1,8,128], index: 2, kind: output, shape index: {}]
  %s3 = sld [smem:[#allocation0]]
  $region30: #{tpu_custom_call.1} parent=0
    _
  %s5 = ssub.s32 1, %s3
  %s6 = scalar_select 0, %s5, %s3
  $region1: #{tpu_custom_call.1} parent=0
    #allocation2 [shape = 'u8[8192]{0}', space=vmem, size = 0x2000, scoped, tag = 'input window, operand 0, single buffered']
    #allocation3 [shape = 's32[1]{0}', space=sflag, size = 0x4, scoped, tag = 'scoped memory for tpu_custom_call.1']
    #allocation4 [shape = 's32[1]{0}', space=sflag, size = 0x4, scoped, tag = 'scoped memory for tpu_custom_call.1']
    #allocation5 [shape = 'u8[8192]{0}', space=vmem, size = 0x2000, scoped, tag = 'input window, operand 1, single buffered']
    #allocation6 [shape = 's32[1]{0}', space=sflag, size = 0x4, scoped, tag = 'scoped memory for tpu_custom_call.1']
    #allocation7 [shape = 'u8[4096]{0}', space=vmem, size = 0x1000, scoped, tag = 'output window, operand 0, single buffered']
    %7 = vsyncpa [#allocation3], 0
    %8 = vsyncpa [#allocation6], 0
    %9 = vsyncpa [#allocation4], 0
    // Predicated region
    $region2: #{tpu_custom_call.1} parent=1 // pred_check
      _
    $region3: #{tpu_custom_call.1} parent=1 // pred_check_branch
      %11 = sbr.rel (0) target = $region5
    $region4: #{tpu_custom_call.1} parent=1 // pred_region
      %s12 = sadd.s32 0, 0
      %p13 = scmp.lt.s32.totalorder %s12, 0
      %s14 = scalar_select %p13, %s12, 0
      %s15 = smul.u32 2, %s14
      %s17 = ssub.s32 256, 256
      %18 = vsyncadd [#allocation3], %s17
      %s19 = smul.addr %s15, 128
      %s20 = scalar_lea.hbm %s0, %s19
      %s21 = sshll.u32 [#allocation2], 4
      %s22 = int_to_ptr.vmem [resolvable:$true] %s21
      %27 = dma.hbm_to_vmem [thread:$0]  %s20, 256, %s22, [#allocation3], 128, 128, 8
    $region5: #{tpu_custom_call.1} parent=1 // pred_fallthru
      _
    // Predicated region
    $region6: #{tpu_custom_call.1} parent=1 // pred_check
      _
    $region7: #{tpu_custom_call.1} parent=1 // pred_check_branch
      %29 = sbr.rel (0) target = $region9
    $region8: #{tpu_custom_call.1} parent=1 // pred_region
      %s30 = sadd.s32 0, 0
      %p31 = scmp.lt.s32.totalorder %s30, 0
      %s32 = scalar_select %p31, %s30, 0
      %s33 = smul.u32 2, %s32
      %s35 = ssub.s32 256, 256
      %36 = vsyncadd [#allocation6], %s35
      %s37 = smul.addr %s33, 128
      %s38 = scalar_lea.hbm %s1, %s37
      %s39 = sshll.u32 [#allocation5], 4
      %s40 = int_to_ptr.vmem [resolvable:$true] %s39
      %45 = dma.hbm_to_vmem [thread:$0]  %s38, 256, %s40, [#allocation6], 128, 128, 8
    $region9: #{tpu_custom_call.1} parent=1 // pred_fallthru
      _
    // Predicated region
    $region10: #{tpu_custom_call.1} parent=1 // pred_check
      _
    $region11: #{tpu_custom_call.1} parent=1 // pred_check_branch
      %47 = sbr.rel (0) target = $region13
    $region12: #{tpu_custom_call.1} parent=1 // pred_region
      %48 = dma.done [#allocation3], 256
    $region13: #{tpu_custom_call.1} parent=1 // pred_fallthru
      _
    // Predicated region
    $region14: #{tpu_custom_call.1} parent=1 // pred_check
      _
    $region15: #{tpu_custom_call.1} parent=1 // pred_check_branch
      %50 = sbr.rel (0) target = $region17
    $region16: #{tpu_custom_call.1} parent=1 // pred_region
      %51 = dma.done [#allocation6], 256
    $region17: #{tpu_custom_call.1} parent=1 // pred_fallthru
      _
    %s52 = sadd.s32 0, 0
    %p53 = scmp.lt.s32.totalorder %s52, 0
    %s54 = scalar_select %p53, %s52, 0
    %s55 = smul.u32 2, %s54
    %s56 = sadd.s32 0, 0
    %p57 = scmp.lt.s32.totalorder %s56, 0
    %s58 = scalar_select %p57, %s56, 0
    %s59 = smul.u32 2, %s58
    %p60 = scmp.eq.s32.totalorder 0, 0
    // Predicated region
    $region18: #{tpu_custom_call.1} parent=1 // pred_check
      %p61 = pneg %p60
    $region19: #{tpu_custom_call.1} parent=1 // pred_check_branch
      %63 = sbr.rel (%p61) target = $region21
    $region20: #{tpu_custom_call.1} parent=1 // pred_region
      %64 = vst [vmem:[#allocation7] sm:$0xff] 0.0
    $region21: #{tpu_custom_call.1} parent=1 // pred_fallthru
      _
    %v65 = vld [vmem:[#allocation2] sm:$0xff]
    %v66 = vld [vmem:[#allocation2 + $0x8] sm:$0xff]
    %v67 = vld [vmem:[#allocation5] sm:$0xff]
    %v68 = vld [vmem:[#allocation5 + $0x8] sm:$0xff]
    %v69 = vsub.f32 %v65, %v67
    %v70 = vsub.f32 %v66, %v68
    %v71 = vmul.f32 %v69, %v69
    %v72 = vmul.f32 %v70, %v70
    %v73 = vadd.f32 %v71, %v72
    %v74 = vld [vmem:[#allocation7] sm:$0xff]
    %v75 = vadd.f32 %v74, %v73
    %76 = vst [vmem:[#allocation7] sm:$0xff] %v75
    // Predicated region
    $region22: #{tpu_custom_call.1} parent=1 // pred_check
      _
    $region23: #{tpu_custom_call.1} parent=1 // pred_check_branch
      %78 = sbr.rel (0) target = $region25
    $region24: #{tpu_custom_call.1} parent=1 // pred_region
      %s80 = ssub.s32 128, 128
      %81 = vsyncadd [#allocation4], %s80
      %s83 = sshll.u32 [#allocation7], 4
      %s84 = int_to_ptr.vmem [resolvable:$true] %s83
      %86 = dma.vmem_to_hbm [thread:$0]  %s84, 128, %s2, [#allocation4]
    $region25: #{tpu_custom_call.1} parent=1 // pred_fallthru
      _
    // Predicated region
    $region26: #{tpu_custom_call.1} parent=1 // pred_check
      _
    $region27: #{tpu_custom_call.1} parent=1 // pred_check_branch
      %88 = sbr.rel (0) target = $region29
    $region28: #{tpu_custom_call.1} parent=1 // pred_region
      %89 = dma.done [#allocation4], 128
    $region29: #{tpu_custom_call.1} parent=1 // pred_fallthru
      _
    %90 = vsyncpa [#allocation3], 1
    %91 = vsyncpa [#allocation6], 1
    %92 = vsyncpa [#allocation4], 1

</llo_original>
